<compile_context>
chip_gen: v6e
topology: v6e:2x2x1
jax: 0.10.0
libtpu: 0.0.40
codegen_flags: <defaults>
</compile_context>

<pallas_src>
import functools
import math

import jax
import jax.numpy as jnp
from jax import lax
from jax.experimental import pallas as pl
from jax.experimental.pallas import tpu as pltpu


def _attention_kernel(q_ref, k_ref, v_ref, o_ref, attn_ref, *, scale):
    # Batch dim is squeezed out by the BlockSpecs:
    #   q_ref: (TQ, D), k_ref/v_ref: (S, D), o_ref: (TQ, D), attn_ref: (TQ, S)
    q = q_ref[...]
    k = k_ref[...]
    v = v_ref[...]

    # Fold 1/sqrt(d_k) into the (TQ, D) q tile (cheaper than scaling (TQ, S)).
    qs = q * jnp.asarray(scale, dtype=q.dtype)

    # scores = Q @ K^T : contract on D without an explicit transpose of K.
    scores = lax.dot_general(
        qs, k,
        dimension_numbers=(((1,), (1,)), ((), ())),
        preferred_element_type=jnp.float32,
    )  # (TQ, S) f32

    # Numerically stable softmax along the key axis.
    m = jnp.max(scores, axis=-1, keepdims=True)
    e = jnp.exp(scores - m)
    denom = jnp.sum(e, axis=-1, keepdims=True)
    attn = e * pl.reciprocal(denom, approx=True)  # EUP slot, ~free next to exp

    # out = attn @ V : feed V's native dtype to the MXU, accumulate in f32.
    out = lax.dot_general(
        attn.astype(v.dtype), v,
        dimension_numbers=(((1,), (0,)), ((), ())),
        preferred_element_type=jnp.float32,
    )  # (TQ, D) f32

    o_ref[...] = out.astype(o_ref.dtype)
    attn_ref[...] = attn.astype(attn_ref.dtype)


def attention(Q, K, V, d_k, *, q_block=256, attn_dtype=None):
    """Pallas TPU scaled dot-product attention.

    Q, K, V: (B, S, D) arrays. Returns (out (B, S, D), attn (B, S, S)).
    `attn_dtype` optionally lowers the precision of the (large) attn output
    to cut HBM writeback; defaults to Q.dtype to match the PyTorch module.
    """
    B, S, D = Q.shape
    assert K.shape == (B, S, D) and V.shape == (B, S, D)
    attn_dtype = Q.dtype if attn_dtype is None else attn_dtype

    # Query-tile size: multiple of 8 sublanes and a divisor of S, else fall
    # back to a single q block (full-extent dims are always legal).
    tq = min(q_block, S)
    if S % tq != 0 or tq % 8 != 0:
        tq = S
    n_q = S // tq

    kernel = functools.partial(
        _attention_kernel, scale=1.0 / math.sqrt(float(d_k))
    )

    out_shapes = (
        jax.ShapeDtypeStruct((B, S, D), Q.dtype),
        jax.ShapeDtypeStruct((B, S, S), attn_dtype),
    )

    in_specs = [
        pl.BlockSpec((pl.Squeezed(), tq, D), lambda b, i: (b, i, 0)),  # Q tile
        pl.BlockSpec((pl.Squeezed(), S, D), lambda b, i: (b, 0, 0)),   # full K
        pl.BlockSpec((pl.Squeezed(), S, D), lambda b, i: (b, 0, 0)),   # full V
    ]
    out_specs = (
        pl.BlockSpec((pl.Squeezed(), tq, D), lambda b, i: (b, i, 0)),  # out
        pl.BlockSpec((pl.Squeezed(), tq, S), lambda b, i: (b, i, 0)),  # attn
    )

    return pl.pallas_call(
        kernel,
        out_shape=out_shapes,
        grid=(B, n_q),
        in_specs=in_specs,
        out_specs=out_specs,
        compiler_params=pltpu.CompilerParams(
            dimension_semantics=("parallel", "parallel"),
        ),
    )(Q, K, V)


def attention_ref(Q, K, V, d_k):
    scores = jnp.matmul(Q, jnp.swapaxes(K, -1, -2)) / jnp.sqrt(jnp.float32(d_k))
    attn = jax.nn.softmax(scores, axis=-1)
    return jnp.matmul(attn, V), attn


if __name__ == "__main__":
    key = jax.random.PRNGKey(0)
    kq, kk, kv = jax.random.split(key, 3)

    # Small but lane-dense shapes: D = S = 128 -> full-width (unmasked) stores.
    B, S, D = 2, 128, 128
    d_k = D

    Q = jax.random.normal(kq, (B, S, D), dtype=jnp.float32)
    K = jax.random.normal(kk, (B, S, D), dtype=jnp.float32)
    V = jax.random.normal(kv, (B, S, D), dtype=jnp.float32)

    out, attn = attention(Q, K, V, d_k)
    out = jax.block_until_ready(out)
    attn = jax.block_until_ready(attn)

    out_ref, attn_ref_v = attention_ref(Q, K, V, d_k)

    assert out.shape == (B, S, D)
    assert attn.shape == (B, S, S)
    # Tolerance slightly loosened vs. 1e-5 because of the EUP approx reciprocal
    # in the softmax normalization; everything else accumulates in f32.
    assert jnp.allclose(attn, attn_ref_v, atol=5e-3, rtol=5e-3)
    assert jnp.allclose(out, out_ref, atol=5e-3, rtol=5e-3)

    print("KERNEL_OK")
</pallas_src>

<mosaic_0001>
module attributes {stable_mosaic.version = 11 : i64} {
  func.func @_attention_kernel(%arg0: i32, %arg1: i32, %arg2: memref<1x128x128xf32, #tpu.memory_space<vmem>>, %arg3: memref<1x128x128xf32, #tpu.memory_space<vmem>>, %arg4: memref<1x128x128xf32, #tpu.memory_space<vmem>>, %arg5: memref<1x128x128xf32, #tpu.memory_space<vmem>>, %arg6: memref<1x128x128xf32, #tpu.memory_space<vmem>>) attributes {dimension_semantics = [#tpu.dimension_semantics<parallel>, #tpu.dimension_semantics<parallel>], iteration_bounds = array<i64: 2, 1>, scalar_prefetch = 0 : i64, scratch_operands = 0 : i64, tpu.core_type = #tpu.core_type<tc>, window_params = [{transform_indices = @transform_0, window_bounds = array<i64: 1, 128, 128>}, {transform_indices = @transform_1, window_bounds = array<i64: 1, 128, 128>}, {transform_indices = @transform_2, window_bounds = array<i64: 1, 128, 128>}, {transform_indices = @transform_3, window_bounds = array<i64: 1, 128, 128>}, {transform_indices = @transform_4, window_bounds = array<i64: 1, 128, 128>}]} {
    %c0 = arith.constant 0 : index
    %c0_0 = arith.constant 0 : index
    %c0_1 = arith.constant 0 : index
    %0 = vector.load %arg2[%c0, %c0_0, %c0_1] : memref<1x128x128xf32, #tpu.memory_space<vmem>>, vector<1x128x128xf32>
    %1 = vector.shape_cast %0 : vector<1x128x128xf32> to vector<128x128xf32>
    %c0_2 = arith.constant 0 : index
    %c0_3 = arith.constant 0 : index
    %c0_4 = arith.constant 0 : index
    %2 = vector.load %arg3[%c0_2, %c0_3, %c0_4] : memref<1x128x128xf32, #tpu.memory_space<vmem>>, vector<1x128x128xf32>
    %3 = vector.shape_cast %2 : vector<1x128x128xf32> to vector<128x128xf32>
    %c0_5 = arith.constant 0 : index
    %c0_6 = arith.constant 0 : index
    %c0_7 = arith.constant 0 : index
    %4 = vector.load %arg4[%c0_5, %c0_6, %c0_7] : memref<1x128x128xf32, #tpu.memory_space<vmem>>, vector<1x128x128xf32>
    %5 = vector.shape_cast %4 : vector<1x128x128xf32> to vector<128x128xf32>
    %cst = arith.constant 0.0883883461 : f32
    %6 = vector.broadcast %cst : f32 to vector<128x128xf32>
    %7 = arith.mulf %1, %6 : vector<128x128xf32>
    %cst_8 = arith.constant dense<0.000000e+00> : vector<128x128xf32>
    %8 = tpu.matmul %7, %3, %cst_8 {dimension_numbers = #tpu.dot_dimension_numbers<[1], [1], [0], [0], [0, 0, 1, 0], [], []>} : vector<128x128xf32>, vector<128x128xf32>, vector<128x128xf32> -> vector<128x128xf32>
    %cst_9 = arith.constant dense<0xFF800000> : vector<128xf32>
    %9 = vector.multi_reduction <maximumf>, %8, %cst_9 [1] : vector<128x128xf32> to vector<128xf32>
    %10 = vector.shape_cast %9 : vector<128xf32> to vector<128x1xf32>
    %11 = vector.broadcast %10 : vector<128x1xf32> to vector<128x128xf32>
    %12 = arith.subf %8, %11 : vector<128x128xf32>
    %13 = math.exp %12 : vector<128x128xf32>
    %cst_10 = arith.constant dense<0.000000e+00> : vector<128xf32>
    %14 = vector.multi_reduction <add>, %13, %cst_10 [1] : vector<128x128xf32> to vector<128xf32>
    %15 = vector.shape_cast %14 : vector<128xf32> to vector<128x1xf32>
    %16 = tpu.reciprocal %15 {approx = true} : vector<128x1xf32> -> vector<128x1xf32>
    %17 = vector.broadcast %16 : vector<128x1xf32> to vector<128x128xf32>
    %18 = arith.mulf %13, %17 : vector<128x128xf32>
    %cst_11 = arith.constant dense<0.000000e+00> : vector<128x128xf32>
    %19 = tpu.matmul %18, %5, %cst_11 {dimension_numbers = #tpu.dot_dimension_numbers<[1], [0], [0], [1], [0, 0, 1, 1], [], []>} : vector<128x128xf32>, vector<128x128xf32>, vector<128x128xf32> -> vector<128x128xf32>
    %c0_12 = arith.constant 0 : index
    %c0_13 = arith.constant 0 : index
    %c0_14 = arith.constant 0 : index
    %20 = vector.load %arg5[%c0_12, %c0_13, %c0_14] : memref<1x128x128xf32, #tpu.memory_space<vmem>>, vector<1x128x128xf32>
    %21 = vector.shape_cast %20 : vector<1x128x128xf32> to vector<128x128xf32>
    %22 = vector.shape_cast %19 : vector<128x128xf32> to vector<1x128x128xf32>
    tpu.vector_store %arg5[%c0_12, %c0_13, %c0_14], %22 {strides = array<i32>} : memref<1x128x128xf32, #tpu.memory_space<vmem>>, vector<1x128x128xf32>,
    %c0_15 = arith.constant 0 : index
    %c0_16 = arith.constant 0 : index
    %c0_17 = arith.constant 0 : index
    %23 = vector.load %arg6[%c0_15, %c0_16, %c0_17] : memref<1x128x128xf32, #tpu.memory_space<vmem>>, vector<1x128x128xf32>
    %24 = vector.shape_cast %23 : vector<1x128x128xf32> to vector<128x128xf32>
    %25 = vector.shape_cast %18 : vector<128x128xf32> to vector<1x128x128xf32>
    tpu.vector_store %arg6[%c0_15, %c0_16, %c0_17], %25 {strides = array<i32>} : memref<1x128x128xf32, #tpu.memory_space<vmem>>, vector<1x128x128xf32>,
    return
  }
  func.func @transform_0(%arg0: i32, %arg1: i32) -> (i32, i32, i32) {
    %c0_i32 = arith.constant 0 : i32
    %c0_i32_0 = arith.constant 0 : i32
    return %arg0, %arg1, %c0_i32 : i32, i32, i32
  }
  func.func @transform_1(%arg0: i32, %arg1: i32) -> (i32, i32, i32) {
    %c0_i32 = arith.constant 0 : i32
    %c0_i32_0 = arith.constant 0 : i32
    %c0_i32_1 = arith.constant 0 : i32
    return %arg0, %c0_i32, %c0_i32_0 : i32, i32, i32
  }
  func.func @transform_2(%arg0: i32, %arg1: i32) -> (i32, i32, i32) {
    %c0_i32 = arith.constant 0 : i32
    %c0_i32_0 = arith.constant 0 : i32
    %c0_i32_1 = arith.constant 0 : i32
    return %arg0, %c0_i32, %c0_i32_0 : i32, i32, i32
  }
  func.func @transform_3(%arg0: i32, %arg1: i32) -> (i32, i32, i32) {
    %c0_i32 = arith.constant 0 : i32
    %c0_i32_0 = arith.constant 0 : i32
    return %arg0, %arg1, %c0_i32 : i32, i32, i32
  }
  func.func @transform_4(%arg0: i32, %arg1: i32) -> (i32, i32, i32) {
    %c0_i32 = arith.constant 0 : i32
    %c0_i32_0 = arith.constant 0 : i32
    return %arg0, %arg1, %c0_i32 : i32, i32, i32
  }
}

</mosaic_0001>

<llo_original>
// kernel: tpu_custom_call.1
$region0: #{tpu_custom_call.1}
  #allocation0 [shape = 'u32[]', space=smem, size = 0x4, offset = 0x4, fixed_abs, tag = 'smem constant byte address 0x4 - core index']
  #allocation1 [shape = 'u32[144,128]{1,0:T(1,128)}', space=vmem, size = 0x12000, scoped, tag = 'internal scratch']
  %s0 = inlined_call_operand.hbm [shape: f32[2,128,128], index: 0, kind: input, shape index: {}]
  %s1 = inlined_call_operand.hbm [shape: f32[2,128,128], index: 1, kind: input, shape index: {}]
  %s2 = inlined_call_operand.hbm [shape: f32[2,128,128], index: 2, kind: input, shape index: {}]
  %s3 = inlined_call_operand.hbm [shape: f32[2,128,128], index: 3, kind: output, shape index: {0}]
  %s4 = inlined_call_operand.hbm [shape: f32[2,128,128], index: 4, kind: output, shape index: {1}]
  %5 = xla_tuple %s3, %s4
  %s6 = sld [smem:[#allocation0]]
  $region65: #{tpu_custom_call.1} parent=0
    _
  %s8 = ssub.s32 1, %s6
  %s9 = scalar_select 0, %s8, %s6
  $region1: #{tpu_custom_call.1} parent=0
    #allocation2 [shape = 'u8[131072]{0}', space=vmem, size = 0x20000, scoped, tag = 'input window, operand 0']
    #allocation3 [shape = 's32[2]{0}', space=sflag, size = 0x8, scoped, tag = 'scoped memory for tpu_custom_call.1']
    #allocation4 [shape = 's32[2]{0}', space=sflag, size = 0x8, scoped, tag = 'scoped memory for tpu_custom_call.1']
    #allocation5 [shape = 'u8[131072]{0}', space=vmem, size = 0x20000, scoped, tag = 'input window, operand 1']
    #allocation6 [shape = 's32[2]{0}', space=sflag, size = 0x8, scoped, tag = 'scoped memory for tpu_custom_call.1']
    #allocation7 [shape = 'u8[131072]{0}', space=vmem, size = 0x20000, scoped, tag = 'input window, operand 2']
    #allocation8 [shape = 'u8[131072]{0}', space=vmem, size = 0x20000, scoped, tag = 'output window, operand 0']
    #allocation9 [shape = 'u8[131072]{0}', space=vmem, size = 0x20000, scoped, tag = 'output window, operand 1']
    #allocation10 [shape = 's32[2]{0}', space=sflag, size = 0x8, scoped, tag = 'scoped memory for tpu_custom_call.1']
    %10 = vsyncpa [#allocation3], 0
    %s11 = scalar_lea.sflag [#allocation3], 1
    %12 = vsyncpa %s11, 0
    %13 = vsyncpa [#allocation6], 0
    %s14 = scalar_lea.sflag [#allocation6], 1
    %15 = vsyncpa %s14, 0
    %16 = vsyncpa [#allocation4], 0
    %s17 = scalar_lea.sflag [#allocation4], 1
    %18 = vsyncpa %s17, 0
    %19 = vsyncpa [#allocation10], 0
    %s20 = scalar_lea.sflag [#allocation10], 1
    %21 = vsyncpa %s20, 0
    loop: start=0, step=1, limit=4
    $region2: #{tpu_custom_call.1} parent=1 // loop_pre_header
      _
    $region3: #{tpu_custom_call.1} parent=1 // loop_header
      %s23 = sphi 0, %s27
      %p24 = scmp.ge.s32.totalorder %s23, 4
      %s30 = sphi 0, %s42
      %s31 = sphi 0, %s38
      %s32 = sphi 0, %s30
      %s33 = sphi 0, %s31
      %s34 = sphi 0, %s32
      %s35 = sphi 0, %s33
      %s47 = sphi 0, %s49
      %s50 = sphi 0, %s47
      %s51 = sphi 0, %s50
      %s67 = sphi 0, %s51
      %s73 = sphi 0, %s75
      %s76 = sphi 0, %s73
      %s77 = sphi 0, %s76
      %s93 = sphi 0, %s77
      %s99 = sphi 0, %s101
      %s102 = sphi 0, %s99
      %s103 = sphi 0, %s102
      %s119 = sphi 0, %s103
      %s127 = sphi 0, %s129
      %s130 = sphi 0, %s127
      %s131 = sphi 0, %s130
      %s147 = sphi 0, %s131
      %s155 = sphi 0, %s157
      %s158 = sphi 0, %s155
      %s159 = sphi 0, %s158
      %s175 = sphi 0, %s159
    $region4: #{tpu_custom_call.1} parent=1 // loop_header_branch
      %26 = sbr.rel (%p24) target = $region8
    $region5: #{tpu_custom_call.1} parent=1 // loop_body
      %s28 = ssub.s32 %s23, 1
      %s29 = ssub.s32 %s23, 2
      %s36 = sadd.s32 1, %s31
      %p37 = scmp.ge.s32.totalorder %s36, 1
      %s38 = scalar_select %p37, 0, %s36
      %s39 = sadd.s32 1, %s30
      %s40 = scalar_select %p37, %s39, %s30
      %p41 = scmp.ge.s32.totalorder %s40, 2
      %s42 = scalar_select %p41, 0, %s40
      %s43 = ssub.s32 %s30, %s42
      %s44 = ssub.s32 %s31, %s38
      %s45 = sor.u32 %s43, %s44
      %p46 = scmp.eq.s32.totalorder %s45, 0
      %s48 = sadd.s32 %s47, 1
      %s49 = scalar_select %p46, %s47, %s48
      %p52 = pneg %p46
      %p53 = scmp.eq.s32.totalorder %s23, 1
      %p54 = por %p52, %p53
      %p55 = scmp.ne.s32.totalorder %s47, %s50
      %p56 = scmp.eq.s32.totalorder %s23, 0
      %p57 = por %p55, %p56
      %p58 = scmp.ne.s32.totalorder %s47, %s50
      %p59 = scmp.eq.s32.totalorder %s28, 1
      %p60 = por %p58, %p59
      %p61 = scmp.ne.s32.totalorder %s50, %s51
      %p62 = scmp.eq.s32.totalorder %s28, 0
      %p63 = por %p61, %p62
      %p64 = scmp.ne.s32.totalorder %s50, %s51
      %p65 = scmp.eq.s32.totalorder %s29, 1
      %p66 = por %p64, %p65
      %p68 = scmp.ne.s32.totalorder %s51, %s67
      %p69 = scmp.eq.s32.totalorder %s29, 0
      %p70 = por %p68, %p69
      %s71 = ssub.s32 %s30, %s42
      %p72 = scmp.eq.s32.totalorder %s71, 0
      %s74 = sadd.s32 %s73, 1
      %s75 = scalar_select %p72, %s73, %s74
      %p78 = pneg %p72
      %p79 = scmp.eq.s32.totalorder %s23, 1
      %p80 = por %p78, %p79
      %p81 = scmp.ne.s32.totalorder %s73, %s76
      %p82 = scmp.eq.s32.totalorder %s23, 0
      %p83 = por %p81, %p82
      %p84 = scmp.ne.s32.totalorder %s73, %s76
      %p85 = scmp.eq.s32.totalorder %s28, 1
      %p86 = por %p84, %p85
      %p87 = scmp.ne.s32.totalorder %s76, %s77
      %p88 = scmp.eq.s32.totalorder %s28, 0
      %p89 = por %p87, %p88
      %p90 = scmp.ne.s32.totalorder %s76, %s77
      %p91 = scmp.eq.s32.totalorder %s29, 1
      %p92 = por %p90, %p91
      %p94 = scmp.ne.s32.totalorder %s77, %s93
      %p95 = scmp.eq.s32.totalorder %s29, 0
      %p96 = por %p94, %p95
      %s97 = ssub.s32 %s30, %s42
      %p98 = scmp.eq.s32.totalorder %s97, 0
      %s100 = sadd.s32 %s99, 1
      %s101 = scalar_select %p98, %s99, %s100
      %p104 = pneg %p98
      %p105 = scmp.eq.s32.totalorder %s23, 1
      %p106 = por %p104, %p105
      %p107 = scmp.ne.s32.totalorder %s99, %s102
      %p108 = scmp.eq.s32.totalorder %s23, 0
      %p109 = por %p107, %p108
      %p110 = scmp.ne.s32.totalorder %s99, %s102
      %p111 = scmp.eq.s32.totalorder %s28, 1
      %p112 = por %p110, %p111
      %p113 = scmp.ne.s32.totalorder %s102, %s103
      %p114 = scmp.eq.s32.totalorder %s28, 0
      %p115 = por %p113, %p114
      %p116 = scmp.ne.s32.totalorder %s102, %s103
      %p117 = scmp.eq.s32.totalorder %s29, 1
      %p118 = por %p116, %p117
      %p120 = scmp.ne.s32.totalorder %s103, %s119
      %p121 = scmp.eq.s32.totalorder %s29, 0
      %p122 = por %p120, %p121
      %s123 = ssub.s32 %s30, %s42
      %s124 = ssub.s32 %s31, %s38
      %s125 = sor.u32 %s123, %s124
      %p126 = scmp.eq.s32.totalorder %s125, 0
      %s128 = sadd.s32 %s127, 1
      %s129 = scalar_select %p126, %s127, %s128
      %p132 = pneg %p126
      %p133 = scmp.eq.s32.totalorder %s23, 1
      %p134 = por %p132, %p133
      %p135 = scmp.ne.s32.totalorder %s127, %s130
      %p136 = scmp.eq.s32.totalorder %s23, 0
      %p137 = por %p135, %p136
      %p138 = scmp.ne.s32.totalorder %s127, %s130
      %p139 = scmp.eq.s32.totalorder %s28, 1
      %p140 = por %p138, %p139
      %p141 = scmp.ne.s32.totalorder %s130, %s131
      %p142 = scmp.eq.s32.totalorder %s28, 0
      %p143 = por %p141, %p142
      %p144 = scmp.ne.s32.totalorder %s130, %s131
      %p145 = scmp.eq.s32.totalorder %s29, 1
      %p146 = por %p144, %p145
      %p148 = scmp.ne.s32.totalorder %s131, %s147
      %p149 = scmp.eq.s32.totalorder %s29, 0
      %p150 = por %p148, %p149
      %s151 = ssub.s32 %s30, %s42
      %s152 = ssub.s32 %s31, %s38
      %s153 = sor.u32 %s151, %s152
      %p154 = scmp.eq.s32.totalorder %s153, 0
      %s156 = sadd.s32 %s155, 1
      %s157 = scalar_select %p154, %s155, %s156
      %p160 = pneg %p154
      %p161 = scmp.eq.s32.totalorder %s23, 1
      %p162 = por %p160, %p161
      %p163 = scmp.ne.s32.totalorder %s155, %s158
      %p164 = scmp.eq.s32.totalorder %s23, 0
      %p165 = por %p163, %p164
      %p166 = scmp.ne.s32.totalorder %s155, %s158
      %p167 = scmp.eq.s32.totalorder %s28, 1
      %p168 = por %p166, %p167
      %p169 = scmp.ne.s32.totalorder %s158, %s159
      %p170 = scmp.eq.s32.totalorder %s28, 0
      %p171 = por %p169, %p170
      %p172 = scmp.ne.s32.totalorder %s158, %s159
      %p173 = scmp.eq.s32.totalorder %s29, 1
      %p174 = por %p172, %p173
      %p176 = scmp.ne.s32.totalorder %s159, %s175
      %p177 = scmp.eq.s32.totalorder %s29, 0
      %p178 = por %p176, %p177
      %p179 = scmp.le.s32.totalorder 1, %s23
      %p180 = scmp.lt.s32.totalorder %s23, 3
      %p181 = pnand %p179, %p180
      %p182 = pneg %p181
      // Predicated region
      $region9: #{tpu_custom_call.1} parent=5 // pred_check
        _
      $region10: #{tpu_custom_call.1} parent=5 // pred_check_branch
        %184 = sbr.rel (%p181) target = $region12
      $region11: #{tpu_custom_call.1} parent=5 // pred_region
        %s185 = ssub.s32 %s23, 1
      $region12: #{tpu_custom_call.1} parent=5 // pred_fallthru
        _
      %p186 = scmp.lt.s32.totalorder %s23, 2
      // Predicated region
      $region13: #{tpu_custom_call.1} parent=5 // pred_check
        %p187 = pneg %p186
      $region14: #{tpu_custom_call.1} parent=5 // pred_check_branch
        %189 = sbr.rel (%p187) target = $region16
      $region15: #{tpu_custom_call.1} parent=5 // pred_region
        // Predicated region
        $region17: #{tpu_custom_call.1} parent=15 // pred_check
          %p190 = pneg %p57
        $region18: #{tpu_custom_call.1} parent=15 // pred_check_branch
          %192 = sbr.rel (%p190) target = $region20
        $region19: #{tpu_custom_call.1} parent=15 // pred_region
          %s193 = sand.u32 %s47, 1
          %s194 = scalar_lea.sflag [#allocation3], %s193
          %s195 = sand.u32 %s47, 1
          %s196 = smul.addr %s195, 128
          %s197 = scalar_lea.vmem [#allocation2], %s196
          %s198 = smul.u32 16, %s31
          %s200 = ssub.s32 2048, 2048
          %201 = vsyncadd %s194, %s200
          %s202 = smul.addr %s30, 16
          %s203 = sadd.s32 %s198, %s202
          %s204 = smul.addr %s203, 128
          %s205 = scalar_lea.hbm %s0, %s204
          %s206 = sshll.u32 %s197, 4
          %s207 = int_to_ptr.vmem [resolvable:$true] %s206
          %212 = dma.hbm_to_vmem [thread:$0]  %s205, 2048, %s207, %s194, 128, 128, 8
        $region20: #{tpu_custom_call.1} parent=15 // pred_fallthru
          _
        // Predicated region
        $region21: #{tpu_custom_call.1} parent=15 // pred_check
          %p213 = pneg %p83
        $region22: #{tpu_custom_call.1} parent=15 // pred_check_branch
          %215 = sbr.rel (%p213) target = $region24
        $region23: #{tpu_custom_call.1} parent=15 // pred_region
          %s216 = sand.u32 %s23, 1
          %s217 = scalar_lea.sflag [#allocation6], %s216
          %s218 = sand.u32 %s73, 1
          %s219 = smul.addr %s218, 128
          %s220 = scalar_lea.vmem [#allocation5], %s219
          %s222 = ssub.s32 2048, 2048
          %223 = vsyncadd %s217, %s222
          %s224 = smul.addr %s30, 16
          %s225 = smul.addr %s224, 128
          %s226 = scalar_lea.hbm %s1, %s225
          %s227 = sshll.u32 %s220, 4
          %s228 = int_to_ptr.vmem [resolvable:$true] %s227
          %233 = dma.hbm_to_vmem [thread:$0]  %s226, 2048, %s228, %s217, 128, 128, 8
        $region24: #{tpu_custom_call.1} parent=15 // pred_fallthru
          _
        // Predicated region
        $region25: #{tpu_custom_call.1} parent=15 // pred_check
          %p234 = pneg %p109
        $region26: #{tpu_custom_call.1} parent=15 // pred_check_branch
          %236 = sbr.rel (%p234) target = $region28
        $region27: #{tpu_custom_call.1} parent=15 // pred_region
          %s237 = sand.u32 %s23, 1
          %s238 = scalar_lea.sflag [#allocation6], %s237
          %s239 = sand.u32 %s99, 1
          %s240 = smul.addr %s239, 128
          %s241 = scalar_lea.vmem [#allocation7], %s240
          %s243 = ssub.s32 2048, 2048
          %244 = vsyncadd %s238, %s243
          %s245 = smul.addr %s30, 16
          %s246 = smul.addr %s245, 128
          %s247 = scalar_lea.hbm %s2, %s246
          %s248 = sshll.u32 %s241, 4
          %s249 = int_to_ptr.vmem [resolvable:$true] %s248
          %254 = dma.hbm_to_vmem [thread:$0]  %s247, 2048, %s249, %s238, 128, 128, 8
        $region28: #{tpu_custom_call.1} parent=15 // pred_fallthru
          _
      $region16: #{tpu_custom_call.1} parent=5 // pred_fallthru
        _
      %p255 = scmp.le.s32.totalorder 1, %s23
      %p256 = scmp.lt.s32.totalorder %s23, 3
      %p257 = pnand %p255, %p256
      %p258 = pneg %p257
      // Predicated region
      $region29: #{tpu_custom_call.1} parent=5 // pred_check
        _
      $region30: #{tpu_custom_call.1} parent=5 // pred_check_branch
        %260 = sbr.rel (%p257) target = $region32
      $region31: #{tpu_custom_call.1} parent=5 // pred_region
        %s261 = ssub.s32 %s23, 1
        %s262 = sand.u32 %s50, 1
        %s263 = scalar_lea.sflag [#allocation3], %s262
        %s264 = sand.u32 %s50, 1
        %s265 = smul.addr %s264, 128
        %s266 = scalar_lea.vmem [#allocation2], %s265
        // Predicated region
        $region33: #{tpu_custom_call.1} parent=31 // pred_check
          %p267 = pneg %p63
        $region34: #{tpu_custom_call.1} parent=31 // pred_check_branch
          %269 = sbr.rel (%p267) target = $region36
        $region35: #{tpu_custom_call.1} parent=31 // pred_region
          %270 = dma.done %s263, 2048
        $region36: #{tpu_custom_call.1} parent=31 // pred_fallthru
          _
        %s271 = sand.u32 %s28, 1
        %s272 = scalar_lea.sflag [#allocation6], %s271
        %s273 = sand.u32 %s76, 1
        %s274 = smul.addr %s273, 128
        %s275 = scalar_lea.vmem [#allocation5], %s274
        // Predicated region
        $region37: #{tpu_custom_call.1} parent=31 // pred_check
          %p276 = pneg %p89
        $region38: #{tpu_custom_call.1} parent=31 // pred_check_branch
          %278 = sbr.rel (%p276) target = $region40
        $region39: #{tpu_custom_call.1} parent=31 // pred_region
          %279 = dma.done %s272, 2048
        $region40: #{tpu_custom_call.1} parent=31 // pred_fallthru
          _
        %s280 = sand.u32 %s28, 1
        %s281 = scalar_lea.sflag [#allocation6], %s280
        %s282 = sand.u32 %s102, 1
        %s283 = smul.addr %s282, 128
        %s284 = scalar_lea.vmem [#allocation7], %s283
        // Predicated region
        $region41: #{tpu_custom_call.1} parent=31 // pred_check
          %p285 = pneg %p115
        $region42: #{tpu_custom_call.1} parent=31 // pred_check_branch
          %287 = sbr.rel (%p285) target = $region44
        $region43: #{tpu_custom_call.1} parent=31 // pred_region
          %288 = dma.done %s281, 2048
        $region44: #{tpu_custom_call.1} parent=31 // pred_fallthru
          _
        %s289 = sand.u32 %s50, 1
        %s290 = scalar_lea.sflag [#allocation3], %s289
        %s291 = sand.u32 %s50, 1
        %s292 = smul.addr %s291, 128
        %s293 = scalar_lea.vmem [#allocation2], %s292
        %p294 = pneg %p63
        %p295 = pneg %p60
        %s296 = sand.u32 %s28, 1
        %s297 = scalar_lea.sflag [#allocation6], %s296
        %s298 = sand.u32 %s76, 1
        %s299 = smul.addr %s298, 128
        %s300 = scalar_lea.vmem [#allocation5], %s299
        %p301 = pneg %p89
        %p302 = pneg %p86
        %s303 = sand.u32 %s28, 1
        %s304 = scalar_lea.sflag [#allocation6], %s303
        %s305 = sand.u32 %s102, 1
        %s306 = smul.addr %s305, 128
        %s307 = scalar_lea.vmem [#allocation7], %s306
        %p308 = pneg %p115
        %p309 = pneg %p112
        %p310 = pneg %p143
        %p311 = pneg %p140
        %s312 = sand.u32 %s130, 1
        %s313 = scalar_lea.sflag [#allocation4], %s312
        %s314 = sand.u32 %s130, 1
        %s315 = smul.addr %s314, 128
        %s316 = scalar_lea.vmem [#allocation8], %s315
        %p317 = pneg %p171
        %p318 = pneg %p168
        %s319 = sand.u32 %s158, 1
        %s320 = scalar_lea.sflag [#allocation10], %s319
        %s321 = sand.u32 %s158, 1
        %s322 = smul.addr %s321, 128
        %s323 = scalar_lea.vmem [#allocation9], %s322
        %s324 = smul.u32 16, %s33
        %s325 = smul.u32 16, %s33
        %s326 = smul.u32 16, %s33
        %v327 = vld [vmem:[%s266] sm:$0xff]
        %v328 = vld [vmem:[%s266 + $0x8] sm:$0xff]
        %v329 = vld [vmem:[%s266 + $0x10] sm:$0xff]
        %v330 = vld [vmem:[%s266 + $0x18] sm:$0xff]
        %v331 = vld [vmem:[%s266 + $0x20] sm:$0xff]
        %v332 = vld [vmem:[%s266 + $0x28] sm:$0xff]
        %v333 = vld [vmem:[%s266 + $0x30] sm:$0xff]
        %v334 = vld [vmem:[%s266 + $0x38] sm:$0xff]
        %v335 = vld [vmem:[%s266 + $0x40] sm:$0xff]
        %v336 = vld [vmem:[%s266 + $0x48] sm:$0xff]
        %v337 = vld [vmem:[%s266 + $0x50] sm:$0xff]
        %v338 = vld [vmem:[%s266 + $0x58] sm:$0xff]
        %v339 = vld [vmem:[%s266 + $0x60] sm:$0xff]
        %v340 = vld [vmem:[%s266 + $0x68] sm:$0xff]
        %v341 = vld [vmem:[%s266 + $0x70] sm:$0xff]
        %v342 = vld [vmem:[%s266 + $0x78] sm:$0xff]
        %v343 = vld [vmem:[%s275] sm:$0xff]
        %v344 = vld [vmem:[%s275 + $0x8] sm:$0xff]
        %v345 = vld [vmem:[%s275 + $0x10] sm:$0xff]
        %v346 = vld [vmem:[%s275 + $0x18] sm:$0xff]
        %v347 = vld [vmem:[%s275 + $0x20] sm:$0xff]
        %v348 = vld [vmem:[%s275 + $0x28] sm:$0xff]
        %v349 = vld [vmem:[%s275 + $0x30] sm:$0xff]
        %v350 = vld [vmem:[%s275 + $0x38] sm:$0xff]
        %v351 = vld [vmem:[%s275 + $0x40] sm:$0xff]
        %v352 = vld [vmem:[%s275 + $0x48] sm:$0xff]
        %v353 = vld [vmem:[%s275 + $0x50] sm:$0xff]
        %v354 = vld [vmem:[%s275 + $0x58] sm:$0xff]
        %v355 = vld [vmem:[%s275 + $0x60] sm:$0xff]
        %v356 = vld [vmem:[%s275 + $0x68] sm:$0xff]
        %v357 = vld [vmem:[%s275 + $0x70] sm:$0xff]
        %v358 = vld [vmem:[%s275 + $0x78] sm:$0xff]
        %v359 = vld [vmem:[%s284] sm:$0xff]
        %v360 = vld [vmem:[%s284 + $0x8] sm:$0xff]
        %v361 = vld [vmem:[%s284 + $0x10] sm:$0xff]
        %v362 = vld [vmem:[%s284 + $0x18] sm:$0xff]
        %v363 = vld [vmem:[%s284 + $0x20] sm:$0xff]
        %v364 = vld [vmem:[%s284 + $0x28] sm:$0xff]
        %v365 = vld [vmem:[%s284 + $0x30] sm:$0xff]
        %v366 = vld [vmem:[%s284 + $0x38] sm:$0xff]
        %v367 = vld [vmem:[%s284 + $0x40] sm:$0xff]
        %v368 = vld [vmem:[%s284 + $0x48] sm:$0xff]
        %v369 = vld [vmem:[%s284 + $0x50] sm:$0xff]
        %v370 = vld [vmem:[%s284 + $0x58] sm:$0xff]
        %v371 = vld [vmem:[%s284 + $0x60] sm:$0xff]
        %v372 = vld [vmem:[%s284 + $0x68] sm:$0xff]
        %v373 = vld [vmem:[%s284 + $0x70] sm:$0xff]
        %v374 = vld [vmem:[%s284 + $0x78] sm:$0xff]
        %v375 = vmul.f32 %v327, 0.088388346
        %v376 = vmul.f32 %v328, 0.088388346
        %v377 = vmul.f32 %v329, 0.088388346
        %v378 = vmul.f32 %v330, 0.088388346
        %v379 = vmul.f32 %v331, 0.088388346
        %v380 = vmul.f32 %v332, 0.088388346
        %v381 = vmul.f32 %v333, 0.088388346
        %v382 = vmul.f32 %v334, 0.088388346
        %v383 = vmul.f32 %v335, 0.088388346
        %v384 = vmul.f32 %v336, 0.088388346
        %v385 = vmul.f32 %v337, 0.088388346
        %v386 = vmul.f32 %v338, 0.088388346
        %v387 = vmul.f32 %v339, 0.088388346
        %v388 = vmul.f32 %v340, 0.088388346
        %v389 = vmul.f32 %v341, 0.088388346
        %v390 = vmul.f32 %v342, 0.088388346
        %391 = vmatprep.subr.mxu0 0.0
        %392 = vmatpush1.xpose.msra.mxu0 %v358
        %393 = vmatprep.subr.mxu0 0.0
        %394 = vmatpush1.xpose.msra.mxu0 %v357
        %395 = vmatprep.subr.mxu0 0.0
        %396 = vmatpush1.xpose.msra.mxu0 %v356
        %397 = vmatprep.subr.mxu0 0.0
        %398 = vmatpush1.xpose.msra.mxu0 %v355
        %399 = vmatprep.subr.mxu0 0.0
        %400 = vmatpush1.xpose.msra.mxu0 %v354
        %401 = vmatprep.subr.mxu0 0.0
        %402 = vmatpush1.xpose.msra.mxu0 %v353
        %403 = vmatprep.subr.mxu0 0.0
        %404 = vmatpush1.xpose.msra.mxu0 %v352
        %405 = vmatprep.subr.mxu0 0.0
        %406 = vmatpush1.xpose.msra.mxu0 %v351
        %407 = vmatprep.subr.mxu0 0.0
        %408 = vmatpush1.xpose.msra.mxu0 %v350
        %409 = vmatprep.subr.mxu0 0.0
        %410 = vmatpush1.xpose.msra.mxu0 %v349
        %411 = vmatprep.subr.mxu0 0.0
        %412 = vmatpush1.xpose.msra.mxu0 %v348
        %413 = vmatprep.subr.mxu0 0.0
        %414 = vmatpush1.xpose.msra.mxu0 %v347
        %415 = vmatprep.subr.mxu0 0.0
        %416 = vmatpush1.xpose.msra.mxu0 %v346
        %417 = vmatprep.subr.mxu0 0.0
        %418 = vmatpush1.xpose.msra.mxu0 %v345
        %419 = vmatprep.subr.mxu0 0.0
        %420 = vmatpush1.xpose.msra.mxu0 %v344
        %421 = vmatprep.subr.mxu0 0.0
        %422 = vmatpush1.xpose.msra.mxu0 %v343
        %423 = vmatprep.subr.mxu0 0.0
        %424 = vmatpush2.xpose.msra.mxu0 0.0
        %425 = vmatprep.subr.mxu0 0.0
        %426 = vmatpush2.xpose.msra.mxu0 0.0
        %427 = vmatprep.subr.mxu0 0.0
        %428 = vmatpush2.xpose.msra.mxu0 0.0
        %429 = vmatprep.subr.mxu0 0.0
        %430 = vmatpush2.xpose.msra.mxu0 0.0
        %431 = vmatprep.subr.mxu0 0.0
        %432 = vmatpush2.xpose.msra.mxu0 0.0
        %433 = vmatprep.subr.mxu0 0.0
        %434 = vmatpush2.xpose.msra.mxu0 0.0
        %435 = vmatprep.subr.mxu0 0.0
        %436 = vmatpush2.xpose.msra.mxu0 0.0
        %437 = vmatprep.subr.mxu0 0.0
        %438 = vmatpush2.xpose.msra.mxu0 0.0
        %439 = vmatprep.subr.mxu0 0.0
        %440 = vmatpush2.xpose.msra.mxu0 0.0
        %441 = vmatprep.subr.mxu0 0.0
        %442 = vmatpush2.xpose.msra.mxu0 0.0
        %443 = vmatprep.subr.mxu0 0.0
        %444 = vmatpush2.xpose.msra.mxu0 0.0
        %445 = vmatprep.subr.mxu0 0.0
        %446 = vmatpush2.xpose.msra.mxu0 0.0
        %447 = vmatprep.subr.mxu0 0.0
        %448 = vmatpush2.xpose.msra.mxu0 0.0
        %449 = vmatprep.subr.mxu0 0.0
        %450 = vmatpush2.xpose.msra.mxu0 0.0
        %451 = vmatprep.subr.mxu0 0.0
        %452 = vmatpush2.xpose.msra.mxu0 0.0
        %453 = vmatprep.subr.mxu0 0.0
        %454 = vmatpush2.xpose.msra.mxu0 0.0
        %455 = vmatprep.mubr.f32.mxu0 0.0
        %456 = vmatmul.mubr.f32.gmra.mxu0 %v375
        %v457 = vpop.f32.mrf.mxu0
        %v458 = vadd.f32 0.0, %v457
        %v459 = vpop.f32.mrf.mxu0
        %460 = vmatprep.mubr.f32.mxu0 0.0
        %461 = vmatmul.mubr.f32.gmra.mxu0 %v376
        %v462 = vpop.f32.mrf.mxu0
        %v463 = vadd.f32 0.0, %v462
        %v464 = vpop.f32.mrf.mxu0
        %465 = vmatprep.mubr.f32.mxu0 0.0
        %466 = vmatmul.mubr.f32.gmra.mxu0 %v377
        %v467 = vpop.f32.mrf.mxu0
        %v468 = vadd.f32 0.0, %v467
        %v469 = vpop.f32.mrf.mxu0
        %470 = vmatprep.mubr.f32.mxu0 0.0
        %471 = vmatmul.mubr.f32.gmra.mxu0 %v378
        %v472 = vpop.f32.mrf.mxu0
        %v473 = vadd.f32 0.0, %v472
        %v474 = vpop.f32.mrf.mxu0
        %475 = vmatprep.mubr.f32.mxu0 0.0
        %476 = vmatmul.mubr.f32.gmra.mxu0 %v379
        %v477 = vpop.f32.mrf.mxu0
        %v478 = vadd.f32 0.0, %v477
        %v479 = vpop.f32.mrf.mxu0
        %480 = vmatprep.mubr.f32.mxu0 0.0
        %481 = vmatmul.mubr.f32.gmra.mxu0 %v380
        %v482 = vpop.f32.mrf.mxu0
        %v483 = vadd.f32 0.0, %v482
        %v484 = vpop.f32.mrf.mxu0
        %485 = vmatprep.mubr.f32.mxu0 0.0
        %486 = vmatmul.mubr.f32.gmra.mxu0 %v381
        %v487 = vpop.f32.mrf.mxu0
        %v488 = vadd.f32 0.0, %v487
        %v489 = vpop.f32.mrf.mxu0
        %490 = vmatprep.mubr.f32.mxu0 0.0
        %491 = vmatmul.mubr.f32.gmra.mxu0 %v382
        %v492 = vpop.f32.mrf.mxu0
        %v493 = vadd.f32 0.0, %v492
        %v494 = vpop.f32.mrf.mxu0
        %495 = vmatprep.mubr.f32.mxu0 0.0
        %496 = vmatmul.mubr.f32.gmra.mxu0 %v383
        %v497 = vpop.f32.mrf.mxu0
        %v498 = vadd.f32 0.0, %v497
        %v499 = vpop.f32.mrf.mxu0
        %500 = vmatprep.mubr.f32.mxu0 0.0
        %501 = vmatmul.mubr.f32.gmra.mxu0 %v384
        %v502 = vpop.f32.mrf.mxu0
        %v503 = vadd.f32 0.0, %v502
        %v504 = vpop.f32.mrf.mxu0
        %505 = vmatprep.mubr.f32.mxu0 0.0
        %506 = vmatmul.mubr.f32.gmra.mxu0 %v385
        %v507 = vpop.f32.mrf.mxu0
        %v508 = vadd.f32 0.0, %v507
        %v509 = vpop.f32.mrf.mxu0
        %510 = vmatprep.mubr.f32.mxu0 0.0
        %511 = vmatmul.mubr.f32.gmra.mxu0 %v386
        %v512 = vpop.f32.mrf.mxu0
        %v513 = vadd.f32 0.0, %v512
        %v514 = vpop.f32.mrf.mxu0
        %515 = vmatprep.mubr.f32.mxu0 0.0
        %516 = vmatmul.mubr.f32.gmra.mxu0 %v387
        %v517 = vpop.f32.mrf.mxu0
        %v518 = vadd.f32 0.0, %v517
        %v519 = vpop.f32.mrf.mxu0
        %520 = vmatprep.mubr.f32.mxu0 0.0
        %521 = vmatmul.mubr.f32.gmra.mxu0 %v388
        %v522 = vpop.f32.mrf.mxu0
        %v523 = vadd.f32 0.0, %v522
        %v524 = vpop.f32.mrf.mxu0
        %525 = vmatprep.mubr.f32.mxu0 0.0
        %526 = vmatmul.mubr.f32.gmra.mxu0 %v389
        %v527 = vpop.f32.mrf.mxu0
        %v528 = vadd.f32 0.0, %v527
        %v529 = vpop.f32.mrf.mxu0
        %530 = vmatprep.mubr.f32.mxu0 0.0
        %531 = vmatmul.mubr.f32.gmra.mxu0 %v390
        %v532 = vpop.f32.mrf.mxu0
        %v533 = vadd.f32 0.0, %v532
        %v534 = vpop.f32.mrf.mxu0
        %535 = vdwg.mxu0
        %536 = vmax.xlane.f32.xlu0 %v458
        %v537 = vpop.xlane.xlu0 %536
        %538 = vmax.xlane.f32.xlu0 %v463
        %v539 = vpop.xlane.xlu0 %538
        %540 = vmax.xlane.f32.xlu0 %v468
        %v541 = vpop.xlane.xlu0 %540
        %542 = vmax.xlane.f32.xlu0 %v473
        %v543 = vpop.xlane.xlu0 %542
        %544 = vmax.xlane.f32.xlu0 %v478
        %v545 = vpop.xlane.xlu0 %544
        %546 = vmax.xlane.f32.xlu0 %v483
        %v547 = vpop.xlane.xlu0 %546
        %548 = vmax.xlane.f32.xlu0 %v488
        %v549 = vpop.xlane.xlu0 %548
        %550 = vmax.xlane.f32.xlu0 %v493
        %v551 = vpop.xlane.xlu0 %550
        %552 = vmax.xlane.f32.xlu0 %v498
        %v553 = vpop.xlane.xlu0 %552
        %554 = vmax.xlane.f32.xlu0 %v503
        %v555 = vpop.xlane.xlu0 %554
        %556 = vmax.xlane.f32.xlu0 %v508
        %v557 = vpop.xlane.xlu0 %556
        %558 = vmax.xlane.f32.xlu0 %v513
        %v559 = vpop.xlane.xlu0 %558
        %560 = vmax.xlane.f32.xlu0 %v518
        %v561 = vpop.xlane.xlu0 %560
        %562 = vmax.xlane.f32.xlu0 %v523
        %v563 = vpop.xlane.xlu0 %562
        %564 = vmax.xlane.f32.xlu0 %v528
        %v565 = vpop.xlane.xlu0 %564
        %566 = vmax.xlane.f32.xlu0 %v533
        %v567 = vpop.xlane.xlu0 %566
        %v568 = vsub.f32 %v458, %v537
        %v569 = vsub.f32 %v463, %v539
        %v570 = vsub.f32 %v468, %v541
        %v571 = vsub.f32 %v473, %v543
        %v572 = vsub.f32 %v478, %v545
        %v573 = vsub.f32 %v483, %v547
        %v574 = vsub.f32 %v488, %v549
        %v575 = vsub.f32 %v493, %v551
        %v576 = vsub.f32 %v498, %v553
        %v577 = vsub.f32 %v503, %v555
        %v578 = vsub.f32 %v508, %v557
        %v579 = vsub.f32 %v513, %v559
        %v580 = vsub.f32 %v518, %v561
        %v581 = vsub.f32 %v523, %v563
        %v582 = vsub.f32 %v528, %v565
        %v583 = vsub.f32 %v533, %v567
        %v584 = vmul.f32 %v568, 1.442695
        %v585 = vpow.pop %v584
        %v586 = vmul.f32 %v569, 1.442695
        %v587 = vpow.pop %v586
        %v588 = vmul.f32 %v570, 1.442695
        %v589 = vpow.pop %v588
        %v590 = vmul.f32 %v571, 1.442695
        %v591 = vpow.pop %v590
        %v592 = vmul.f32 %v572, 1.442695
        %v593 = vpow.pop %v592
        %v594 = vmul.f32 %v573, 1.442695
        %v595 = vpow.pop %v594
        %v596 = vmul.f32 %v574, 1.442695
        %v597 = vpow.pop %v596
        %v598 = vmul.f32 %v575, 1.442695
        %v599 = vpow.pop %v598
        %v600 = vmul.f32 %v576, 1.442695
        %v601 = vpow.pop %v600
        %v602 = vmul.f32 %v577, 1.442695
        %v603 = vpow.pop %v602
        %v604 = vmul.f32 %v578, 1.442695
        %v605 = vpow.pop %v604
        %v606 = vmul.f32 %v579, 1.442695
        %v607 = vpow.pop %v606
        %v608 = vmul.f32 %v580, 1.442695
        %v609 = vpow.pop %v608
        %v610 = vmul.f32 %v581, 1.442695
        %v611 = vpow.pop %v610
        %v612 = vmul.f32 %v582, 1.442695
        %v613 = vpow.pop %v612
        %v614 = vmul.f32 %v583, 1.442695
        %v615 = vpow.pop %v614
        %616 = vadd.xlane.f32.xlu0 %v585
        %v617 = vpop.xlane.xlu0 %616
        %618 = vadd.xlane.f32.xlu0 %v587
        %v619 = vpop.xlane.xlu0 %618
        %620 = vadd.xlane.f32.xlu0 %v589
        %v621 = vpop.xlane.xlu0 %620
        %622 = vadd.xlane.f32.xlu0 %v591
        %v623 = vpop.xlane.xlu0 %622
        %624 = vadd.xlane.f32.xlu0 %v593
        %v625 = vpop.xlane.xlu0 %624
        %626 = vadd.xlane.f32.xlu0 %v595
        %v627 = vpop.xlane.xlu0 %626
        %628 = vadd.xlane.f32.xlu0 %v597
        %v629 = vpop.xlane.xlu0 %628
        %630 = vadd.xlane.f32.xlu0 %v599
        %v631 = vpop.xlane.xlu0 %630
        %632 = vadd.xlane.f32.xlu0 %v601
        %v633 = vpop.xlane.xlu0 %632
        %634 = vadd.xlane.f32.xlu0 %v603
        %v635 = vpop.xlane.xlu0 %634
        %636 = vadd.xlane.f32.xlu0 %v605
        %v637 = vpop.xlane.xlu0 %636
        %638 = vadd.xlane.f32.xlu0 %v607
        %v639 = vpop.xlane.xlu0 %638
        %640 = vadd.xlane.f32.xlu0 %v609
        %v641 = vpop.xlane.xlu0 %640
        %642 = vadd.xlane.f32.xlu0 %v611
        %v643 = vpop.xlane.xlu0 %642
        %644 = vadd.xlane.f32.xlu0 %v613
        %v645 = vpop.xlane.xlu0 %644
        %646 = vadd.xlane.f32.xlu0 %v615
        %v647 = vpop.xlane.xlu0 %646
        %v648 = vrcp.pop %v617
        %v649 = vrcp.pop %v619
        %v650 = vrcp.pop %v621
        %v651 = vrcp.pop %v623
        %v652 = vrcp.pop %v625
        %v653 = vrcp.pop %v627
        %v654 = vrcp.pop %v629
        %v655 = vrcp.pop %v631
        %v656 = vrcp.pop %v633
        %v657 = vrcp.pop %v635
        %v658 = vrcp.pop %v637
        %v659 = vrcp.pop %v639
        %v660 = vrcp.pop %v641
        %v661 = vrcp.pop %v643
        %v662 = vrcp.pop %v645
        %v663 = vrcp.pop %v647
        %v664 = vmul.f32 %v585, %v648
        %v665 = vmul.f32 %v587, %v649
        %v666 = vmul.f32 %v589, %v650
        %v667 = vmul.f32 %v591, %v651
        %v668 = vmul.f32 %v593, %v652
        %v669 = vmul.f32 %v595, %v653
        %v670 = vmul.f32 %v597, %v654
        %v671 = vmul.f32 %v599, %v655
        %v672 = vmul.f32 %v601, %v656
        %v673 = vmul.f32 %v603, %v657
        %v674 = vmul.f32 %v605, %v658
        %v675 = vmul.f32 %v607, %v659
        %v676 = vmul.f32 %v609, %v660
        %v677 = vmul.f32 %v611, %v661
        %v678 = vmul.f32 %v613, %v662
        %v679 = vmul.f32 %v615, %v663
        %680 = vmatprep.subr.mxu0 0.0
        %681 = vmatpush1.msra.mxu0 %v374
        %682 = vmatprep.subr.mxu0 0.0
        %683 = vmatpush1.msra.mxu0 %v373
        %684 = vmatprep.subr.mxu0 0.0
        %685 = vmatpush1.msra.mxu0 %v372
        %686 = vmatprep.subr.mxu0 0.0
        %687 = vmatpush1.msra.mxu0 %v371
        %688 = vmatprep.subr.mxu0 0.0
        %689 = vmatpush1.msra.mxu0 %v370
        %690 = vmatprep.subr.mxu0 0.0
        %691 = vmatpush1.msra.mxu0 %v369
        %692 = vmatprep.subr.mxu0 0.0
        %693 = vmatpush1.msra.mxu0 %v368
        %694 = vmatprep.subr.mxu0 0.0
        %695 = vmatpush1.msra.mxu0 %v367
        %696 = vmatprep.subr.mxu0 0.0
        %697 = vmatpush1.msra.mxu0 %v366
        %698 = vmatprep.subr.mxu0 0.0
        %699 = vmatpush1.msra.mxu0 %v365
        %700 = vmatprep.subr.mxu0 0.0
        %701 = vmatpush1.msra.mxu0 %v364
        %702 = vmatprep.subr.mxu0 0.0
        %703 = vmatpush1.msra.mxu0 %v363
        %704 = vmatprep.subr.mxu0 0.0
        %705 = vmatpush1.msra.mxu0 %v362
        %706 = vmatprep.subr.mxu0 0.0
        %707 = vmatpush1.msra.mxu0 %v361
        %708 = vmatprep.subr.mxu0 0.0
        %709 = vmatpush1.msra.mxu0 %v360
        %710 = vmatprep.subr.mxu0 0.0
        %711 = vmatpush1.msra.mxu0 %v359
        %712 = vmatprep.subr.mxu0 0.0
        %713 = vmatpush2.msra.mxu0 0.0
        %714 = vmatprep.subr.mxu0 0.0
        %715 = vmatpush2.msra.mxu0 0.0
        %716 = vmatprep.subr.mxu0 0.0
        %717 = vmatpush2.msra.mxu0 0.0
        %718 = vmatprep.subr.mxu0 0.0
        %719 = vmatpush2.msra.mxu0 0.0
        %720 = vmatprep.subr.mxu0 0.0
        %721 = vmatpush2.msra.mxu0 0.0
        %722 = vmatprep.subr.mxu0 0.0
        %723 = vmatpush2.msra.mxu0 0.0
        %724 = vmatprep.subr.mxu0 0.0
        %725 = vmatpush2.msra.mxu0 0.0
        %726 = vmatprep.subr.mxu0 0.0
        %727 = vmatpush2.msra.mxu0 0.0
        %728 = vmatprep.subr.mxu0 0.0
        %729 = vmatpush2.msra.mxu0 0.0
        %730 = vmatprep.subr.mxu0 0.0
        %731 = vmatpush2.msra.mxu0 0.0
        %732 = vmatprep.subr.mxu0 0.0
        %733 = vmatpush2.msra.mxu0 0.0
        %734 = vmatprep.subr.mxu0 0.0
        %735 = vmatpush2.msra.mxu0 0.0
        %736 = vmatprep.subr.mxu0 0.0
        %737 = vmatpush2.msra.mxu0 0.0
        %738 = vmatprep.subr.mxu0 0.0
        %739 = vmatpush2.msra.mxu0 0.0
        %740 = vmatprep.subr.mxu0 0.0
        %741 = vmatpush2.msra.mxu0 0.0
        %742 = vmatprep.subr.mxu0 0.0
        %743 = vmatpush2.msra.mxu0 0.0
        %744 = vmatprep.mubr.f32.mxu0 0.0
        %745 = vmatmul.mubr.f32.gmra.mxu0 %v664
        %v746 = vpop.f32.mrf.mxu0
        %v747 = vadd.f32 0.0, %v746
        %v748 = vpop.f32.mrf.mxu0
        %749 = vmatprep.mubr.f32.mxu0 0.0
        %750 = vmatmul.mubr.f32.gmra.mxu0 %v665
        %v751 = vpop.f32.mrf.mxu0
        %v752 = vadd.f32 0.0, %v751
        %v753 = vpop.f32.mrf.mxu0
        %754 = vmatprep.mubr.f32.mxu0 0.0
        %755 = vmatmul.mubr.f32.gmra.mxu0 %v666
        %v756 = vpop.f32.mrf.mxu0
        %v757 = vadd.f32 0.0, %v756
        %v758 = vpop.f32.mrf.mxu0
        %759 = vmatprep.mubr.f32.mxu0 0.0
        %760 = vmatmul.mubr.f32.gmra.mxu0 %v667
        %v761 = vpop.f32.mrf.mxu0
        %v762 = vadd.f32 0.0, %v761
        %v763 = vpop.f32.mrf.mxu0
        %764 = vmatprep.mubr.f32.mxu0 0.0
        %765 = vmatmul.mubr.f32.gmra.mxu0 %v668
        %v766 = vpop.f32.mrf.mxu0
        %v767 = vadd.f32 0.0, %v766
        %v768 = vpop.f32.mrf.mxu0
        %769 = vmatprep.mubr.f32.mxu0 0.0
        %770 = vmatmul.mubr.f32.gmra.mxu0 %v669
        %v771 = vpop.f32.mrf.mxu0
        %v772 = vadd.f32 0.0, %v771
        %v773 = vpop.f32.mrf.mxu0
        %774 = vmatprep.mubr.f32.mxu0 0.0
        %775 = vmatmul.mubr.f32.gmra.mxu0 %v670
        %v776 = vpop.f32.mrf.mxu0
        %v777 = vadd.f32 0.0, %v776
        %v778 = vpop.f32.mrf.mxu0
        %779 = vmatprep.mubr.f32.mxu0 0.0
        %780 = vmatmul.mubr.f32.gmra.mxu0 %v671
        %v781 = vpop.f32.mrf.mxu0
        %v782 = vadd.f32 0.0, %v781
        %v783 = vpop.f32.mrf.mxu0
        %784 = vmatprep.mubr.f32.mxu0 0.0
        %785 = vmatmul.mubr.f32.gmra.mxu0 %v672
        %v786 = vpop.f32.mrf.mxu0
        %v787 = vadd.f32 0.0, %v786
        %v788 = vpop.f32.mrf.mxu0
        %789 = vmatprep.mubr.f32.mxu0 0.0
        %790 = vmatmul.mubr.f32.gmra.mxu0 %v673
        %v791 = vpop.f32.mrf.mxu0
        %v792 = vadd.f32 0.0, %v791
        %v793 = vpop.f32.mrf.mxu0
        %794 = vmatprep.mubr.f32.mxu0 0.0
        %795 = vmatmul.mubr.f32.gmra.mxu0 %v674
        %v796 = vpop.f32.mrf.mxu0
        %v797 = vadd.f32 0.0, %v796
        %v798 = vpop.f32.mrf.mxu0
        %799 = vmatprep.mubr.f32.mxu0 0.0
        %800 = vmatmul.mubr.f32.gmra.mxu0 %v675
        %v801 = vpop.f32.mrf.mxu0
        %v802 = vadd.f32 0.0, %v801
        %v803 = vpop.f32.mrf.mxu0
        %804 = vmatprep.mubr.f32.mxu0 0.0
        %805 = vmatmul.mubr.f32.gmra.mxu0 %v676
        %v806 = vpop.f32.mrf.mxu0
        %v807 = vadd.f32 0.0, %v806
        %v808 = vpop.f32.mrf.mxu0
        %809 = vmatprep.mubr.f32.mxu0 0.0
        %810 = vmatmul.mubr.f32.gmra.mxu0 %v677
        %v811 = vpop.f32.mrf.mxu0
        %v812 = vadd.f32 0.0, %v811
        %v813 = vpop.f32.mrf.mxu0
        %814 = vmatprep.mubr.f32.mxu0 0.0
        %815 = vmatmul.mubr.f32.gmra.mxu0 %v678
        %v816 = vpop.f32.mrf.mxu0
        %v817 = vadd.f32 0.0, %v816
        %v818 = vpop.f32.mrf.mxu0
        %819 = vmatprep.mubr.f32.mxu0 0.0
        %820 = vmatmul.mubr.f32.gmra.mxu0 %v679
        %v821 = vpop.f32.mrf.mxu0
        %v822 = vadd.f32 0.0, %v821
        %v823 = vpop.f32.mrf.mxu0
        %824 = vdwg.mxu0
        %825 = vst [vmem:[%s316] sm:$0xff] %v747
        %826 = vst [vmem:[%s316 + $0x8] sm:$0xff] %v752
        %827 = vst [vmem:[%s316 + $0x10] sm:$0xff] %v757
        %828 = vst [vmem:[%s316 + $0x18] sm:$0xff] %v762
        %829 = vst [vmem:[%s316 + $0x20] sm:$0xff] %v767
        %830 = vst [vmem:[%s316 + $0x28] sm:$0xff] %v772
        %831 = vst [vmem:[%s316 + $0x30] sm:$0xff] %v777
        %832 = vst [vmem:[%s316 + $0x38] sm:$0xff] %v782
        %833 = vst [vmem:[%s316 + $0x40] sm:$0xff] %v787
        %834 = vst [vmem:[%s316 + $0x48] sm:$0xff] %v792
        %835 = vst [vmem:[%s316 + $0x50] sm:$0xff] %v797
        %836 = vst [vmem:[%s316 + $0x58] sm:$0xff] %v802
        %837 = vst [vmem:[%s316 + $0x60] sm:$0xff] %v807
        %838 = vst [vmem:[%s316 + $0x68] sm:$0xff] %v812
        %839 = vst [vmem:[%s316 + $0x70] sm:$0xff] %v817
        %840 = vst [vmem:[%s316 + $0x78] sm:$0xff] %v822
        %841 = vst [vmem:[%s323] sm:$0xff] %v664
        %842 = vst [vmem:[%s323 + $0x8] sm:$0xff] %v665
        %843 = vst [vmem:[%s323 + $0x10] sm:$0xff] %v666
        %844 = vst [vmem:[%s323 + $0x18] sm:$0xff] %v667
        %845 = vst [vmem:[%s323 + $0x20] sm:$0xff] %v668
        %846 = vst [vmem:[%s323 + $0x28] sm:$0xff] %v669
        %847 = vst [vmem:[%s323 + $0x30] sm:$0xff] %v670
        %848 = vst [vmem:[%s323 + $0x38] sm:$0xff] %v671
        %849 = vst [vmem:[%s323 + $0x40] sm:$0xff] %v672
        %850 = vst [vmem:[%s323 + $0x48] sm:$0xff] %v673
        %851 = vst [vmem:[%s323 + $0x50] sm:$0xff] %v674
        %852 = vst [vmem:[%s323 + $0x58] sm:$0xff] %v675
        %853 = vst [vmem:[%s323 + $0x60] sm:$0xff] %v676
        %854 = vst [vmem:[%s323 + $0x68] sm:$0xff] %v677
        %855 = vst [vmem:[%s323 + $0x70] sm:$0xff] %v678
        %856 = vst [vmem:[%s323 + $0x78] sm:$0xff] %v679
        %s857 = sand.u32 %s130, 1
        %s858 = scalar_lea.sflag [#allocation4], %s857
        %s859 = sand.u32 %s130, 1
        %s860 = smul.addr %s859, 128
        %s861 = scalar_lea.vmem [#allocation8], %s860
        %s862 = sand.u32 %s158, 1
        %s863 = scalar_lea.sflag [#allocation10], %s862
        %s864 = sand.u32 %s158, 1
        %s865 = smul.addr %s864, 128
        %s866 = scalar_lea.vmem [#allocation9], %s865
        // Predicated region
        $region45: #{tpu_custom_call.1} parent=31 // pred_check
          %p867 = pneg %p140
        $region46: #{tpu_custom_call.1} parent=31 // pred_check_branch
          %869 = sbr.rel (%p867) target = $region48
        $region47: #{tpu_custom_call.1} parent=31 // pred_region
          %s870 = smul.u32 16, %s33
          %s872 = ssub.s32 2048, 2048
          %873 = vsyncadd %s858, %s872
          %s874 = smul.addr %s32, 16
          %s875 = sadd.s32 %s870, %s874
          %s876 = smul.addr %s875, 128
          %s877 = scalar_lea.hbm %s3, %s876
          %s878 = sshll.u32 %s861, 4
          %s879 = int_to_ptr.vmem [resolvable:$true] %s878
          %884 = dma.vmem_to_hbm [thread:$0]  %s879, 2048, %s877, %s858, 128, 128, 8
        $region48: #{tpu_custom_call.1} parent=31 // pred_fallthru
          _
        // Predicated region
        $region49: #{tpu_custom_call.1} parent=31 // pred_check
          %p885 = pneg %p168
        $region50: #{tpu_custom_call.1} parent=31 // pred_check_branch
          %887 = sbr.rel (%p885) target = $region52
        $region51: #{tpu_custom_call.1} parent=31 // pred_region
          %s888 = smul.u32 16, %s33
          %s890 = ssub.s32 2048, 2048
          %891 = vsyncadd %s863, %s890
          %s892 = smul.addr %s32, 16
          %s893 = sadd.s32 %s888, %s892
          %s894 = smul.addr %s893, 128
          %s895 = scalar_lea.hbm %s4, %s894
          %s896 = sshll.u32 %s866, 4
          %s897 = int_to_ptr.vmem [resolvable:$true] %s896
          %902 = dma.vmem_to_hbm [thread:$0]  %s897, 2048, %s895, %s863, 128, 128, 8
        $region52: #{tpu_custom_call.1} parent=31 // pred_fallthru
          _
      $region32: #{tpu_custom_call.1} parent=5 // pred_fallthru
        _
      %p903 = scmp.le.s32.totalorder 2, %s23
      // Predicated region
      $region53: #{tpu_custom_call.1} parent=5 // pred_check
        %p904 = pneg %p903
      $region54: #{tpu_custom_call.1} parent=5 // pred_check_branch
        %906 = sbr.rel (%p904) target = $region56
      $region55: #{tpu_custom_call.1} parent=5 // pred_region
        %s907 = ssub.s32 %s23, 2
        // Predicated region
        $region57: #{tpu_custom_call.1} parent=55 // pred_check
          %p908 = pneg %p146
        $region58: #{tpu_custom_call.1} parent=55 // pred_check_branch
          %910 = sbr.rel (%p908) target = $region60
        $region59: #{tpu_custom_call.1} parent=55 // pred_region
          %s911 = sand.u32 %s131, 1
          %s912 = scalar_lea.sflag [#allocation4], %s911
          %s913 = sand.u32 %s131, 1
          %s914 = smul.addr %s913, 128
          %s915 = scalar_lea.vmem [#allocation8], %s914
          %916 = dma.done %s912, 2048
        $region60: #{tpu_custom_call.1} parent=55 // pred_fallthru
          _
        // Predicated region
        $region61: #{tpu_custom_call.1} parent=55 // pred_check
          %p917 = pneg %p174
        $region62: #{tpu_custom_call.1} parent=55 // pred_check_branch
          %919 = sbr.rel (%p917) target = $region64
        $region63: #{tpu_custom_call.1} parent=55 // pred_region
          %s920 = sand.u32 %s159, 1
          %s921 = scalar_lea.sflag [#allocation10], %s920
          %s922 = sand.u32 %s159, 1
          %s923 = smul.addr %s922, 128
          %s924 = scalar_lea.vmem [#allocation9], %s923
          %925 = dma.done %s921, 2048
        $region64: #{tpu_custom_call.1} parent=55 // pred_fallthru
          _
      $region56: #{tpu_custom_call.1} parent=5 // pred_fallthru
        _
    $region6: #{tpu_custom_call.1} parent=1 // loop_footer
      %s27 = sadd.s32 1, %s23
    $region7: #{tpu_custom_call.1} parent=1 // loop_footer_branch
      %22 = sbr.rel target = $region3
    $region8: #{tpu_custom_call.1} parent=1 // loop_exit
      _
    %926 = vsyncpa [#allocation3], 1
    %s927 = scalar_lea.sflag [#allocation3], 1
    %928 = vsyncpa %s927, 1
    %929 = vsyncpa [#allocation6], 1
    %s930 = scalar_lea.sflag [#allocation6], 1
    %931 = vsyncpa %s930, 1
    %932 = vsyncpa [#allocation4], 1
    %s933 = scalar_lea.sflag [#allocation4], 1
    %934 = vsyncpa %s933, 1
    %935 = vsyncpa [#allocation10], 1
    %s936 = scalar_lea.sflag [#allocation10], 1
    %937 = vsyncpa %s936, 1

</llo_original>
